<compile_context>
chip_gen: v5e
topology: v5e:2x2
jax: 0.10.0
libtpu: 0.0.40
codegen_flags: <defaults>
</compile_context>

<pallas_src>
import math
import jax
import jax.numpy as jnp
from jax import lax
from jax.experimental import pallas as pl
from jax.experimental.pallas import tpu as pltpu

EPS = 1e-12


def _hann_window(kernel_size: int):
    # torch.hann_window(kernel_size + 2, periodic=False)[1:-1]
    return [0.5 * (1.0 - math.cos(2.0 * math.pi * (i + 1) / (kernel_size + 1)))
            for i in range(kernel_size)]


def _pick_block_channels(NC, H, W, Hp, Wp, H_out, W_out, in_itemsize, out_itemsize,
                         budget_bytes=24 * 1024 * 1024, max_bc=512):
    """Largest channel block that divides NC, satisfies the lane-tiling rule
    (multiple of 128 or the full extent) and fits a conservative VMEM budget
    (double-buffered in/out blocks + f32 scratch)."""
    def need(bc):
        return (2 * H * W * bc * in_itemsize            # input block, double buffered
                + 2 * H_out * W_out * bc * out_itemsize  # output block, double buffered
                + Hp * Wp * bc * 4                       # padded x**2 scratch (f32)
                + H_out * Wp * bc * 4                    # row-pass scratch (f32)
                + H_out * W_out * bc * 4)                # accumulator scratch (f32)
    if NC % 128 != 0:
        # Lane constraint: last block dim must be a multiple of 128 or the full extent.
        # TODO(synk): add spatial blocking for huge (H, W) with small/ragged N*C.
        return NC
    bc = 128
    while bc < max_bc and NC % (bc * 2) == 0 and need(bc * 2) <= budget_bytes:
        bc *= 2
    return bc


def l2_pool2d(x: jax.Array, kernel_size: int = 3, stride: int = 2,
              padding: int = 1) -> jax.Array:
    """x: (N, C, H, W) float array -> (N, C, H_out, W_out)."""
    N, C, H, W = x.shape
    NC = N * C
    H_out = (H + 2 * padding - kernel_size) // stride + 1
    W_out = (W + 2 * padding - kernel_size) // stride + 1
    Hp, Wp = H + 2 * padding, W + 2 * padding

    win = _hann_window(kernel_size)        # static python floats, closed over
    norm = sum(win) ** 2

    # Layout plumbing: (N, C, H, W) -> (H, W, N*C): channels go on lanes.
    x_l = jnp.transpose(x.reshape(NC, H, W), (1, 2, 0))

    BC = _pick_block_channels(NC, H, W, Hp, Wp, H_out, W_out,
                              x.dtype.itemsize, x.dtype.itemsize)
    grid = (NC // BC,)

    def kernel(x_ref, o_ref, x2_ref, row_ref, acc_ref):
        # 1) square into a zero-padded VMEM scratch. Halo re-zeroed every grid
        #    step since scratch persists across iterations.
        x2_ref[...] = jnp.zeros_like(x2_ref)
        xi = x_ref[...].astype(jnp.float32)
        x2_ref[pl.ds(padding, H), pl.ds(padding, W), :] = xi * xi

        # 2) separable Hann filter, vertical pass: stride-2 lands on the outer
        #    (un-tiled) dim -> pure addressing over contiguous (Wp, BC) tiles.
        row_ref[...] = jnp.zeros_like(row_ref)
        for dy in range(kernel_size):
            row_ref[...] += jnp.float32(win[dy]) * x2_ref[
                pl.ds(dy, H_out, stride), :, :]

        # 3) horizontal pass: stride-2 on sublanes (cheap strided loads); the
        #    lane (channel) axis stays dense.
        acc_ref[...] = jnp.zeros_like(acc_ref)
        for dx in range(kernel_size):
            acc_ref[...] += jnp.float32(win[dx] / norm) * row_ref[
                :, pl.ds(dx, W_out, stride), :]

        # 4) epilogue: lane-dense store of sqrt(acc + eps).
        o_ref[...] = jnp.sqrt(acc_ref[...] + jnp.float32(EPS)).astype(o_ref.dtype)

    out_l = pl.pallas_call(
        kernel,
        out_shape=jax.ShapeDtypeStruct((H_out, W_out, NC), x.dtype),
        grid_spec=pltpu.PrefetchScalarGridSpec(
            num_scalar_prefetch=0,
            grid=grid,
            in_specs=[pl.BlockSpec((H, W, BC), lambda i: (0, 0, i))],
            out_specs=pl.BlockSpec((H_out, W_out, BC), lambda i: (0, 0, i)),
            scratch_shapes=[
                pltpu.VMEM((Hp, Wp, BC), jnp.float32),       # padded x**2
                pltpu.VMEM((H_out, Wp, BC), jnp.float32),    # vertical-pass rows
                pltpu.VMEM((H_out, W_out, BC), jnp.float32), # accumulator
            ],
        ),
        compiler_params=pltpu.CompilerParams(
            dimension_semantics=("parallel",),     # shardable across v7x's 2 TCs
            vmem_limit_bytes=48 * 1024 * 1024,     # < 64 MiB v7x physical VMEM
        ),
    )(x_l)

    # Back to NCHW.
    return jnp.transpose(out_l, (2, 0, 1)).reshape(N, C, H_out, W_out)


def _reference(x: jax.Array, kernel_size=3, stride=2, padding=1) -> jax.Array:
    # Pure-JAX reference: depthwise conv2d of x**2 with the Hann kernel.
    N, C, H, W = x.shape
    win = jnp.asarray(_hann_window(kernel_size), dtype=jnp.float32)
    w2d = win[:, None] * win[None, :]
    w2d = w2d / w2d.sum()
    k = jnp.broadcast_to(w2d, (C, 1, kernel_size, kernel_size))
    out = lax.conv_general_dilated(
        x.astype(jnp.float32) ** 2, k,
        window_strides=(stride, stride),
        padding=((padding, padding), (padding, padding)),
        dimension_numbers=("NCHW", "OIHW", "NCHW"),
        feature_group_count=C,
    )
    return jnp.sqrt(out + EPS).astype(x.dtype)


if __name__ == "__main__":
    k1, k2 = jax.random.split(jax.random.PRNGKey(0))

    # Small NCHW case from the module spec (N*C not a multiple of 128).
    x = jax.random.normal(k1, (2, 4, 16, 16), dtype=jnp.float32)
    y = jax.block_until_ready(l2_pool2d(x))
    y_ref = jax.block_until_ready(_reference(x))
    assert y.shape == (2, 4, 8, 8), y.shape
    assert jnp.allclose(y, y_ref, atol=1e-5, rtol=1e-5), float(
        jnp.max(jnp.abs(y - y_ref)))

    # Lane-dense path: N*C a multiple of 128 (channel-blocked grid).
    x2 = jax.random.normal(k2, (2, 64, 12, 12), dtype=jnp.float32)
    y2 = jax.block_until_ready(l2_pool2d(x2))
    y2_ref = jax.block_until_ready(_reference(x2))
    assert y2.shape == (2, 64, 6, 6), y2.shape
    assert jnp.allclose(y2, y2_ref, atol=1e-5, rtol=1e-5), float(
        jnp.max(jnp.abs(y2 - y2_ref)))

    print("KERNEL_OK")
</pallas_src>

<mosaic_0001>
module attributes {stable_mosaic.version = 11 : i64} {
  func.func @kernel(%arg0: i32, %arg1: memref<16x16x8xf32, #tpu.memory_space<vmem>>, %arg2: memref<8x8x8xf32, #tpu.memory_space<vmem>>, %arg3: memref<18x18x8xf32, #tpu.memory_space<vmem>>, %arg4: memref<8x18x8xf32, #tpu.memory_space<vmem>>, %arg5: memref<8x8x8xf32, #tpu.memory_space<vmem>>) attributes {dimension_semantics = [#tpu.dimension_semantics<parallel>], iteration_bounds = array<i64: 1>, scalar_prefetch = 0 : i64, scratch_operands = 3 : i64, tpu.core_type = #tpu.core_type<tc>, window_params = [{transform_indices = @transform_0, window_bounds = array<i64: 16, 16, 8>}, {transform_indices = @transform_1, window_bounds = array<i64: 8, 8, 8>}]} {
    %cst = arith.constant 0.000000e+00 : f32
    %0 = vector.broadcast %cst : f32 to vector<18x18x8xf32>
    %c0 = arith.constant 0 : index
    %c0_0 = arith.constant 0 : index
    %c0_1 = arith.constant 0 : index
    %1 = vector.load %arg3[%c0, %c0_0, %c0_1] : memref<18x18x8xf32, #tpu.memory_space<vmem>>, vector<18x18x8xf32>
    tpu.vector_store %arg3[%c0, %c0_0, %c0_1], %0 {strides = array<i32>} : memref<18x18x8xf32, #tpu.memory_space<vmem>>, vector<18x18x8xf32>,
    %c0_2 = arith.constant 0 : index
    %c0_3 = arith.constant 0 : index
    %c0_4 = arith.constant 0 : index
    %2 = vector.load %arg1[%c0_2, %c0_3, %c0_4] : memref<16x16x8xf32, #tpu.memory_space<vmem>>, vector<16x16x8xf32>
    %3 = arith.mulf %2, %2 : vector<16x16x8xf32>
    %c1 = arith.constant 1 : index
    %c1_5 = arith.constant 1 : index
    %c0_6 = arith.constant 0 : index
    %4 = vector.load %arg3[%c1, %c1_5, %c0_6] : memref<18x18x8xf32, #tpu.memory_space<vmem>>, vector<16x16x8xf32>
    tpu.vector_store %arg3[%c1, %c1_5, %c0_6], %3 {strides = array<i32>} : memref<18x18x8xf32, #tpu.memory_space<vmem>>, vector<16x16x8xf32>,
    %cst_7 = arith.constant 0.000000e+00 : f32
    %5 = vector.broadcast %cst_7 : f32 to vector<8x18x8xf32>
    %c0_8 = arith.constant 0 : index
    %c0_9 = arith.constant 0 : index
    %c0_10 = arith.constant 0 : index
    %6 = vector.load %arg4[%c0_8, %c0_9, %c0_10] : memref<8x18x8xf32, #tpu.memory_space<vmem>>, vector<8x18x8xf32>
    tpu.vector_store %arg4[%c0_8, %c0_9, %c0_10], %5 {strides = array<i32>} : memref<8x18x8xf32, #tpu.memory_space<vmem>>, vector<8x18x8xf32>,
    %c0_11 = arith.constant 0 : index
    %c0_12 = arith.constant 0 : index
    %c0_13 = arith.constant 0 : index
    %7 = vector.load %arg4[%c0_11, %c0_12, %c0_13] : memref<8x18x8xf32, #tpu.memory_space<vmem>>, vector<8x18x8xf32>
    %c0_14 = arith.constant 0 : index
    %c0_15 = arith.constant 0 : index
    %c0_16 = arith.constant 0 : index
    %8 = tpu.strided_load %arg3[%c0_14, %c0_15, %c0_16] {strides = array<i32: 2, 1, 1>} : memref<18x18x8xf32, #tpu.memory_space<vmem>>, vector<8x18x8xf32>
    %cst_17 = arith.constant 5.000000e-01 : f32
    %9 = vector.broadcast %cst_17 : f32 to vector<8x18x8xf32>
    %10 = arith.mulf %9, %8 : vector<8x18x8xf32>
    %11 = arith.addf %7, %10 : vector<8x18x8xf32>
    %c0_18 = arith.constant 0 : index
    %c0_19 = arith.constant 0 : index
    %c0_20 = arith.constant 0 : index
    %12 = vector.load %arg4[%c0_18, %c0_19, %c0_20] : memref<8x18x8xf32, #tpu.memory_space<vmem>>, vector<8x18x8xf32>
    tpu.vector_store %arg4[%c0_18, %c0_19, %c0_20], %11 {strides = array<i32>} : memref<8x18x8xf32, #tpu.memory_space<vmem>>, vector<8x18x8xf32>,
    %c0_21 = arith.constant 0 : index
    %c0_22 = arith.constant 0 : index
    %c0_23 = arith.constant 0 : index
    %13 = vector.load %arg4[%c0_21, %c0_22, %c0_23] : memref<8x18x8xf32, #tpu.memory_space<vmem>>, vector<8x18x8xf32>
    %c1_24 = arith.constant 1 : index
    %c0_25 = arith.constant 0 : index
    %c0_26 = arith.constant 0 : index
    %14 = tpu.strided_load %arg3[%c1_24, %c0_25, %c0_26] {strides = array<i32: 2, 1, 1>} : memref<18x18x8xf32, #tpu.memory_space<vmem>>, vector<8x18x8xf32>
    %cst_27 = arith.constant 1.000000e+00 : f32
    %15 = vector.broadcast %cst_27 : f32 to vector<8x18x8xf32>
    %16 = arith.mulf %15, %14 : vector<8x18x8xf32>
    %17 = arith.addf %13, %16 : vector<8x18x8xf32>
    %c0_28 = arith.constant 0 : index
    %c0_29 = arith.constant 0 : index
    %c0_30 = arith.constant 0 : index
    %18 = vector.load %arg4[%c0_28, %c0_29, %c0_30] : memref<8x18x8xf32, #tpu.memory_space<vmem>>, vector<8x18x8xf32>
    tpu.vector_store %arg4[%c0_28, %c0_29, %c0_30], %17 {strides = array<i32>} : memref<8x18x8xf32, #tpu.memory_space<vmem>>, vector<8x18x8xf32>,
    %c0_31 = arith.constant 0 : index
    %c0_32 = arith.constant 0 : index
    %c0_33 = arith.constant 0 : index
    %19 = vector.load %arg4[%c0_31, %c0_32, %c0_33] : memref<8x18x8xf32, #tpu.memory_space<vmem>>, vector<8x18x8xf32>
    %c2 = arith.constant 2 : index
    %c0_34 = arith.constant 0 : index
    %c0_35 = arith.constant 0 : index
    %20 = tpu.strided_load %arg3[%c2, %c0_34, %c0_35] {strides = array<i32: 2, 1, 1>} : memref<18x18x8xf32, #tpu.memory_space<vmem>>, vector<8x18x8xf32>
    %cst_36 = arith.constant 5.000000e-01 : f32
    %21 = vector.broadcast %cst_36 : f32 to vector<8x18x8xf32>
    %22 = arith.mulf %21, %20 : vector<8x18x8xf32>
    %23 = arith.addf %19, %22 : vector<8x18x8xf32>
    %c0_37 = arith.constant 0 : index
    %c0_38 = arith.constant 0 : index
    %c0_39 = arith.constant 0 : index
    %24 = vector.load %arg4[%c0_37, %c0_38, %c0_39] : memref<8x18x8xf32, #tpu.memory_space<vmem>>, vector<8x18x8xf32>
    tpu.vector_store %arg4[%c0_37, %c0_38, %c0_39], %23 {strides = array<i32>} : memref<8x18x8xf32, #tpu.memory_space<vmem>>, vector<8x18x8xf32>,
    %cst_40 = arith.constant 0.000000e+00 : f32
    %25 = vector.broadcast %cst_40 : f32 to vector<8x8x8xf32>
    %c0_41 = arith.constant 0 : index
    %c0_42 = arith.constant 0 : index
    %c0_43 = arith.constant 0 : index
    %26 = vector.load %arg5[%c0_41, %c0_42, %c0_43] : memref<8x8x8xf32, #tpu.memory_space<vmem>>, vector<8x8x8xf32>
    tpu.vector_store %arg5[%c0_41, %c0_42, %c0_43], %25 {strides = array<i32>} : memref<8x8x8xf32, #tpu.memory_space<vmem>>, vector<8x8x8xf32>,
    %c0_44 = arith.constant 0 : index
    %c0_45 = arith.constant 0 : index
    %c0_46 = arith.constant 0 : index
    %27 = vector.load %arg5[%c0_44, %c0_45, %c0_46] : memref<8x8x8xf32, #tpu.memory_space<vmem>>, vector<8x8x8xf32>
    %c0_47 = arith.constant 0 : index
    %c0_48 = arith.constant 0 : index
    %c0_49 = arith.constant 0 : index
    %28 = tpu.strided_load %arg4[%c0_47, %c0_48, %c0_49] {strides = array<i32: 1, 2, 1>} : memref<8x18x8xf32, #tpu.memory_space<vmem>>, vector<8x8x8xf32>
    %cst_50 = arith.constant 1.250000e-01 : f32
    %29 = vector.broadcast %cst_50 : f32 to vector<8x8x8xf32>
    %30 = arith.mulf %29, %28 : vector<8x8x8xf32>
    %31 = arith.addf %27, %30 : vector<8x8x8xf32>
    %c0_51 = arith.constant 0 : index
    %c0_52 = arith.constant 0 : index
    %c0_53 = arith.constant 0 : index
    %32 = vector.load %arg5[%c0_51, %c0_52, %c0_53] : memref<8x8x8xf32, #tpu.memory_space<vmem>>, vector<8x8x8xf32>
    tpu.vector_store %arg5[%c0_51, %c0_52, %c0_53], %31 {strides = array<i32>} : memref<8x8x8xf32, #tpu.memory_space<vmem>>, vector<8x8x8xf32>,
    %c0_54 = arith.constant 0 : index
    %c0_55 = arith.constant 0 : index
    %c0_56 = arith.constant 0 : index
    %33 = vector.load %arg5[%c0_54, %c0_55, %c0_56] : memref<8x8x8xf32, #tpu.memory_space<vmem>>, vector<8x8x8xf32>
    %c0_57 = arith.constant 0 : index
    %c1_58 = arith.constant 1 : index
    %c0_59 = arith.constant 0 : index
    %34 = tpu.strided_load %arg4[%c0_57, %c1_58, %c0_59] {strides = array<i32: 1, 2, 1>} : memref<8x18x8xf32, #tpu.memory_space<vmem>>, vector<8x8x8xf32>
    %cst_60 = arith.constant 2.500000e-01 : f32
    %35 = vector.broadcast %cst_60 : f32 to vector<8x8x8xf32>
    %36 = arith.mulf %35, %34 : vector<8x8x8xf32>
    %37 = arith.addf %33, %36 : vector<8x8x8xf32>
    %c0_61 = arith.constant 0 : index
    %c0_62 = arith.constant 0 : index
    %c0_63 = arith.constant 0 : index
    %38 = vector.load %arg5[%c0_61, %c0_62, %c0_63] : memref<8x8x8xf32, #tpu.memory_space<vmem>>, vector<8x8x8xf32>
    tpu.vector_store %arg5[%c0_61, %c0_62, %c0_63], %37 {strides = array<i32>} : memref<8x8x8xf32, #tpu.memory_space<vmem>>, vector<8x8x8xf32>,
    %c0_64 = arith.constant 0 : index
    %c0_65 = arith.constant 0 : index
    %c0_66 = arith.constant 0 : index
    %39 = vector.load %arg5[%c0_64, %c0_65, %c0_66] : memref<8x8x8xf32, #tpu.memory_space<vmem>>, vector<8x8x8xf32>
    %c0_67 = arith.constant 0 : index
    %c2_68 = arith.constant 2 : index
    %c0_69 = arith.constant 0 : index
    %40 = tpu.strided_load %arg4[%c0_67, %c2_68, %c0_69] {strides = array<i32: 1, 2, 1>} : memref<8x18x8xf32, #tpu.memory_space<vmem>>, vector<8x8x8xf32>
    %cst_70 = arith.constant 1.250000e-01 : f32
    %41 = vector.broadcast %cst_70 : f32 to vector<8x8x8xf32>
    %42 = arith.mulf %41, %40 : vector<8x8x8xf32>
    %43 = arith.addf %39, %42 : vector<8x8x8xf32>
    %c0_71 = arith.constant 0 : index
    %c0_72 = arith.constant 0 : index
    %c0_73 = arith.constant 0 : index
    %44 = vector.load %arg5[%c0_71, %c0_72, %c0_73] : memref<8x8x8xf32, #tpu.memory_space<vmem>>, vector<8x8x8xf32>
    tpu.vector_store %arg5[%c0_71, %c0_72, %c0_73], %43 {strides = array<i32>} : memref<8x8x8xf32, #tpu.memory_space<vmem>>, vector<8x8x8xf32>,
    %c0_74 = arith.constant 0 : index
    %c0_75 = arith.constant 0 : index
    %c0_76 = arith.constant 0 : index
    %45 = vector.load %arg5[%c0_74, %c0_75, %c0_76] : memref<8x8x8xf32, #tpu.memory_space<vmem>>, vector<8x8x8xf32>
    %cst_77 = arith.constant 9.99999996E-13 : f32
    %46 = vector.broadcast %cst_77 : f32 to vector<8x8x8xf32>
    %47 = arith.addf %45, %46 : vector<8x8x8xf32>
    %48 = math.sqrt %47 : vector<8x8x8xf32>
    %c0_78 = arith.constant 0 : index
    %c0_79 = arith.constant 0 : index
    %c0_80 = arith.constant 0 : index
    %49 = vector.load %arg2[%c0_78, %c0_79, %c0_80] : memref<8x8x8xf32, #tpu.memory_space<vmem>>, vector<8x8x8xf32>
    tpu.vector_store %arg2[%c0_78, %c0_79, %c0_80], %48 {strides = array<i32>} : memref<8x8x8xf32, #tpu.memory_space<vmem>>, vector<8x8x8xf32>,
    return
  }
  func.func @transform_0(%arg0: i32) -> (i32, i32, i32) {
    %c0_i32 = arith.constant 0 : i32
    %c0_i32_0 = arith.constant 0 : i32
    %c0_i32_1 = arith.constant 0 : i32
    return %c0_i32, %c0_i32_0, %arg0 : i32, i32, i32
  }
  func.func @transform_1(%arg0: i32) -> (i32, i32, i32) {
    %c0_i32 = arith.constant 0 : i32
    %c0_i32_0 = arith.constant 0 : i32
    %c0_i32_1 = arith.constant 0 : i32
    return %c0_i32, %c0_i32_0, %arg0 : i32, i32, i32
  }
}

</mosaic_0001>

<llo_original>
// kernel: tpu_custom_call.1
$region0: #{tpu_custom_call.1}
  #allocation0 [shape = 'u32[]', space=smem, size = 0x4, offset = 0x4, fixed_abs, tag = 'smem constant byte address 0x4 - core index']
  #allocation1 [shape = 'u32[72,128]{1,0:T(1,128)}', space=vmem, size = 0x9000, scoped, tag = 'internal scratch']
  #allocation2 [shape = 'f32[18,18,8]{2,1,0:T(8,128)}', space=vmem, size = 0x36000, scoped, tag = 'scratch operand']
  #allocation3 [shape = 'f32[8,18,8]{2,1,0:T(8,128)}', space=vmem, size = 0x18000, scoped, tag = 'scratch operand']
  #allocation4 [shape = 'f32[8,8,8]{2,1,0:T(8,128)}', space=vmem, size = 0x8000, scoped, tag = 'scratch operand']
  %s0 = inlined_call_operand.vmem [shape: f32[16,16,8], index: 0, kind: input, shape index: {}]
  %s1 = inlined_call_operand.hbm [shape: f32[8,8,8], index: 1, kind: output, shape index: {}]
  %s2 = sld [smem:[#allocation0]]
  $region14: #{tpu_custom_call.1} parent=0
    _
  %s4 = ssub.s32 1, %s2
  %s5 = scalar_select 0, %s4, %s2
  $region1: #{tpu_custom_call.1} parent=0
    #allocation5 [shape = 'u8[32768]{0}', space=vmem, size = 0x8000, scoped, tag = 'output window, operand 0, single buffered']
    #allocation6 [shape = 's32[1]{0}', space=sflag, size = 0x4, scoped, tag = 'scoped memory for tpu_custom_call.1']
    %6 = vsyncpa [#allocation6], 0
    // Predicated region
    $region2: #{tpu_custom_call.1} parent=1 // pred_check
      _
    $region3: #{tpu_custom_call.1} parent=1 // pred_check_branch
      %8 = sbr.rel (0) target = $region5
    $region4: #{tpu_custom_call.1} parent=1 // pred_region
      _
    $region5: #{tpu_custom_call.1} parent=1 // pred_fallthru
      _
    %vm9 = vcmask 64512
    %10 = vst.msk [vmem:[#allocation2] sm:$0xff] %vm9, 0.0
    %11 = vst.msk [vmem:[#allocation2 + $0x8] sm:$0xff] %vm9, 0.0
    %vm12 = vcmask 58368
    %13 = vst.msk [vmem:[#allocation2 + $0x10] sm:$0x3] %vm12, 0.0
    %14 = vst.msk [vmem:[#allocation2 + $0x18] sm:$0xff] %vm9, 0.0
    %15 = vst.msk [vmem:[#allocation2 + $0x20] sm:$0xff] %vm9, 0.0
    %16 = vst.msk [vmem:[#allocation2 + $0x28] sm:$0x3] %vm12, 0.0
    %17 = vst.msk [vmem:[#allocation2 + $0x30] sm:$0xff] %vm9, 0.0
    %18 = vst.msk [vmem:[#allocation2 + $0x38] sm:$0xff] %vm9, 0.0
    %19 = vst.msk [vmem:[#allocation2 + $0x40] sm:$0x3] %vm12, 0.0
    %20 = vst.msk [vmem:[#allocation2 + $0x48] sm:$0xff] %vm9, 0.0
    %21 = vst.msk [vmem:[#allocation2 + $0x50] sm:$0xff] %vm9, 0.0
    %22 = vst.msk [vmem:[#allocation2 + $0x58] sm:$0x3] %vm12, 0.0
    %23 = vst.msk [vmem:[#allocation2 + $0x60] sm:$0xff] %vm9, 0.0
    %24 = vst.msk [vmem:[#allocation2 + $0x68] sm:$0xff] %vm9, 0.0
    %25 = vst.msk [vmem:[#allocation2 + $0x70] sm:$0x3] %vm12, 0.0
    %26 = vst.msk [vmem:[#allocation2 + $0x78] sm:$0xff] %vm9, 0.0
    %27 = vst.msk [vmem:[#allocation2 + $0x80] sm:$0xff] %vm9, 0.0
    %28 = vst.msk [vmem:[#allocation2 + $0x88] sm:$0x3] %vm12, 0.0
    %29 = vst.msk [vmem:[#allocation2 + $0x90] sm:$0xff] %vm9, 0.0
    %30 = vst.msk [vmem:[#allocation2 + $0x98] sm:$0xff] %vm9, 0.0
    %31 = vst.msk [vmem:[#allocation2 + $0xa0] sm:$0x3] %vm12, 0.0
    %32 = vst.msk [vmem:[#allocation2 + $0xa8] sm:$0xff] %vm9, 0.0
    %33 = vst.msk [vmem:[#allocation2 + $0xb0] sm:$0xff] %vm9, 0.0
    %34 = vst.msk [vmem:[#allocation2 + $0xb8] sm:$0x3] %vm12, 0.0
    %35 = vst.msk [vmem:[#allocation2 + $0xc0] sm:$0xff] %vm9, 0.0
    %36 = vst.msk [vmem:[#allocation2 + $0xc8] sm:$0xff] %vm9, 0.0
    %37 = vst.msk [vmem:[#allocation2 + $0xd0] sm:$0x3] %vm12, 0.0
    %38 = vst.msk [vmem:[#allocation2 + $0xd8] sm:$0xff] %vm9, 0.0
    %39 = vst.msk [vmem:[#allocation2 + $0xe0] sm:$0xff] %vm9, 0.0
    %40 = vst.msk [vmem:[#allocation2 + $0xe8] sm:$0x3] %vm12, 0.0
    %41 = vst.msk [vmem:[#allocation2 + $0xf0] sm:$0xff] %vm9, 0.0
    %42 = vst.msk [vmem:[#allocation2 + $0xf8] sm:$0xff] %vm9, 0.0
    %43 = vst.msk [vmem:[#allocation2 + $0x100] sm:$0x3] %vm12, 0.0
    %44 = vst.msk [vmem:[#allocation2 + $0x108] sm:$0xff] %vm9, 0.0
    %45 = vst.msk [vmem:[#allocation2 + $0x110] sm:$0xff] %vm9, 0.0
    %46 = vst.msk [vmem:[#allocation2 + $0x118] sm:$0x3] %vm12, 0.0
    %47 = vst.msk [vmem:[#allocation2 + $0x120] sm:$0xff] %vm9, 0.0
    %48 = vst.msk [vmem:[#allocation2 + $0x128] sm:$0xff] %vm9, 0.0
    %49 = vst.msk [vmem:[#allocation2 + $0x130] sm:$0x3] %vm12, 0.0
    %50 = vst.msk [vmem:[#allocation2 + $0x138] sm:$0xff] %vm9, 0.0
    %51 = vst.msk [vmem:[#allocation2 + $0x140] sm:$0xff] %vm9, 0.0
    %52 = vst.msk [vmem:[#allocation2 + $0x148] sm:$0x3] %vm12, 0.0
    %53 = vst.msk [vmem:[#allocation2 + $0x150] sm:$0xff] %vm9, 0.0
    %54 = vst.msk [vmem:[#allocation2 + $0x158] sm:$0xff] %vm9, 0.0
    %55 = vst.msk [vmem:[#allocation2 + $0x160] sm:$0x3] %vm12, 0.0
    %56 = vst.msk [vmem:[#allocation2 + $0x168] sm:$0xff] %vm9, 0.0
    %57 = vst.msk [vmem:[#allocation2 + $0x170] sm:$0xff] %vm9, 0.0
    %58 = vst.msk [vmem:[#allocation2 + $0x178] sm:$0x3] %vm12, 0.0
    %59 = vst.msk [vmem:[#allocation2 + $0x180] sm:$0xff] %vm9, 0.0
    %60 = vst.msk [vmem:[#allocation2 + $0x188] sm:$0xff] %vm9, 0.0
    %61 = vst.msk [vmem:[#allocation2 + $0x190] sm:$0x3] %vm12, 0.0
    %62 = vst.msk [vmem:[#allocation2 + $0x198] sm:$0xff] %vm9, 0.0
    %63 = vst.msk [vmem:[#allocation2 + $0x1a0] sm:$0xff] %vm9, 0.0
    %64 = vst.msk [vmem:[#allocation2 + $0x1a8] sm:$0x3] %vm12, 0.0
    %v65 = vld [vmem:[%s0] sm:$0xff]
    %v66 = vld [vmem:[%s0 + $0x8] sm:$0xff]
    %v67 = vld [vmem:[%s0 + $0x10] sm:$0xff]
    %v68 = vld [vmem:[%s0 + $0x18] sm:$0xff]
    %v69 = vld [vmem:[%s0 + $0x20] sm:$0xff]
    %v70 = vld [vmem:[%s0 + $0x28] sm:$0xff]
    %v71 = vld [vmem:[%s0 + $0x30] sm:$0xff]
    %v72 = vld [vmem:[%s0 + $0x38] sm:$0xff]
    %v73 = vld [vmem:[%s0 + $0x40] sm:$0xff]
    %v74 = vld [vmem:[%s0 + $0x48] sm:$0xff]
    %v75 = vld [vmem:[%s0 + $0x50] sm:$0xff]
    %v76 = vld [vmem:[%s0 + $0x58] sm:$0xff]
    %v77 = vld [vmem:[%s0 + $0x60] sm:$0xff]
    %v78 = vld [vmem:[%s0 + $0x68] sm:$0xff]
    %v79 = vld [vmem:[%s0 + $0x70] sm:$0xff]
    %v80 = vld [vmem:[%s0 + $0x78] sm:$0xff]
    %v81 = vld [vmem:[%s0 + $0x80] sm:$0xff]
    %v82 = vld [vmem:[%s0 + $0x88] sm:$0xff]
    %v83 = vld [vmem:[%s0 + $0x90] sm:$0xff]
    %v84 = vld [vmem:[%s0 + $0x98] sm:$0xff]
    %v85 = vld [vmem:[%s0 + $0xa0] sm:$0xff]
    %v86 = vld [vmem:[%s0 + $0xa8] sm:$0xff]
    %v87 = vld [vmem:[%s0 + $0xb0] sm:$0xff]
    %v88 = vld [vmem:[%s0 + $0xb8] sm:$0xff]
    %v89 = vld [vmem:[%s0 + $0xc0] sm:$0xff]
    %v90 = vld [vmem:[%s0 + $0xc8] sm:$0xff]
    %v91 = vld [vmem:[%s0 + $0xd0] sm:$0xff]
    %v92 = vld [vmem:[%s0 + $0xd8] sm:$0xff]
    %v93 = vld [vmem:[%s0 + $0xe0] sm:$0xff]
    %v94 = vld [vmem:[%s0 + $0xe8] sm:$0xff]
    %v95 = vld [vmem:[%s0 + $0xf0] sm:$0xff]
    %v96 = vld [vmem:[%s0 + $0xf8] sm:$0xff]
    %v97 = vmul.f32 %v65, %v65
    %v98 = vmul.f32 %v66, %v66
    %v99 = vmul.f32 %v67, %v67
    %v100 = vmul.f32 %v68, %v68
    %v101 = vmul.f32 %v69, %v69
    %v102 = vmul.f32 %v70, %v70
    %v103 = vmul.f32 %v71, %v71
    %v104 = vmul.f32 %v72, %v72
    %v105 = vmul.f32 %v73, %v73
    %v106 = vmul.f32 %v74, %v74
    %v107 = vmul.f32 %v75, %v75
    %v108 = vmul.f32 %v76, %v76
    %v109 = vmul.f32 %v77, %v77
    %v110 = vmul.f32 %v78, %v78
    %v111 = vmul.f32 %v79, %v79
    %v112 = vmul.f32 %v80, %v80
    %v113 = vmul.f32 %v81, %v81
    %v114 = vmul.f32 %v82, %v82
    %v115 = vmul.f32 %v83, %v83
    %v116 = vmul.f32 %v84, %v84
    %v117 = vmul.f32 %v85, %v85
    %v118 = vmul.f32 %v86, %v86
    %v119 = vmul.f32 %v87, %v87
    %v120 = vmul.f32 %v88, %v88
    %v121 = vmul.f32 %v89, %v89
    %v122 = vmul.f32 %v90, %v90
    %v123 = vmul.f32 %v91, %v91
    %v124 = vmul.f32 %v92, %v92
    %v125 = vmul.f32 %v93, %v93
    %v126 = vmul.f32 %v94, %v94
    %v127 = vmul.f32 %v95, %v95
    %v128 = vmul.f32 %v96, %v96
    %s129 = scalar_lea.vmem [#allocation2], 24
    %130 = vst.msk [vmem:[%s129 + $0x1] sm:$0xff] %vm9, %v97
    %131 = vst.msk [vmem:[%s129 + $0x9] sm:$0xff] %vm9, %v98
    %132 = vst.msk [vmem:[%s129 + $0x19] sm:$0xff] %vm9, %v99
    %133 = vst.msk [vmem:[%s129 + $0x21] sm:$0xff] %vm9, %v100
    %134 = vst.msk [vmem:[%s129 + $0x31] sm:$0xff] %vm9, %v101
    %135 = vst.msk [vmem:[%s129 + $0x39] sm:$0xff] %vm9, %v102
    %136 = vst.msk [vmem:[%s129 + $0x49] sm:$0xff] %vm9, %v103
    %137 = vst.msk [vmem:[%s129 + $0x51] sm:$0xff] %vm9, %v104
    %138 = vst.msk [vmem:[%s129 + $0x61] sm:$0xff] %vm9, %v105
    %139 = vst.msk [vmem:[%s129 + $0x69] sm:$0xff] %vm9, %v106
    %140 = vst.msk [vmem:[%s129 + $0x79] sm:$0xff] %vm9, %v107
    %141 = vst.msk [vmem:[%s129 + $0x81] sm:$0xff] %vm9, %v108
    %142 = vst.msk [vmem:[%s129 + $0x91] sm:$0xff] %vm9, %v109
    %143 = vst.msk [vmem:[%s129 + $0x99] sm:$0xff] %vm9, %v110
    %144 = vst.msk [vmem:[%s129 + $0xa9] sm:$0xff] %vm9, %v111
    %145 = vst.msk [vmem:[%s129 + $0xb1] sm:$0xff] %vm9, %v112
    %146 = vst.msk [vmem:[%s129 + $0xc1] sm:$0xff] %vm9, %v113
    %147 = vst.msk [vmem:[%s129 + $0xc9] sm:$0xff] %vm9, %v114
    %148 = vst.msk [vmem:[%s129 + $0xd9] sm:$0xff] %vm9, %v115
    %149 = vst.msk [vmem:[%s129 + $0xe1] sm:$0xff] %vm9, %v116
    %150 = vst.msk [vmem:[%s129 + $0xf1] sm:$0xff] %vm9, %v117
    %151 = vst.msk [vmem:[%s129 + $0xf9] sm:$0xff] %vm9, %v118
    %152 = vst.msk [vmem:[%s129 + $0x109] sm:$0xff] %vm9, %v119
    %153 = vst.msk [vmem:[%s129 + $0x111] sm:$0xff] %vm9, %v120
    %154 = vst.msk [vmem:[%s129 + $0x121] sm:$0xff] %vm9, %v121
    %155 = vst.msk [vmem:[%s129 + $0x129] sm:$0xff] %vm9, %v122
    %156 = vst.msk [vmem:[%s129 + $0x139] sm:$0xff] %vm9, %v123
    %157 = vst.msk [vmem:[%s129 + $0x141] sm:$0xff] %vm9, %v124
    %158 = vst.msk [vmem:[%s129 + $0x151] sm:$0xff] %vm9, %v125
    %159 = vst.msk [vmem:[%s129 + $0x159] sm:$0xff] %vm9, %v126
    %160 = vst.msk [vmem:[%s129 + $0x169] sm:$0xff] %vm9, %v127
    %161 = vst.msk [vmem:[%s129 + $0x171] sm:$0xff] %vm9, %v128
    %162 = vst.msk [vmem:[#allocation3] sm:$0xff] %vm9, 0.0
    %163 = vst.msk [vmem:[#allocation3 + $0x8] sm:$0xff] %vm9, 0.0
    %164 = vst.msk [vmem:[#allocation3 + $0x10] sm:$0x3] %vm12, 0.0
    %165 = vst.msk [vmem:[#allocation3 + $0x18] sm:$0xff] %vm9, 0.0
    %166 = vst.msk [vmem:[#allocation3 + $0x20] sm:$0xff] %vm9, 0.0
    %167 = vst.msk [vmem:[#allocation3 + $0x28] sm:$0x3] %vm12, 0.0
    %168 = vst.msk [vmem:[#allocation3 + $0x30] sm:$0xff] %vm9, 0.0
    %169 = vst.msk [vmem:[#allocation3 + $0x38] sm:$0xff] %vm9, 0.0
    %170 = vst.msk [vmem:[#allocation3 + $0x40] sm:$0x3] %vm12, 0.0
    %171 = vst.msk [vmem:[#allocation3 + $0x48] sm:$0xff] %vm9, 0.0
    %172 = vst.msk [vmem:[#allocation3 + $0x50] sm:$0xff] %vm9, 0.0
    %173 = vst.msk [vmem:[#allocation3 + $0x58] sm:$0x3] %vm12, 0.0
    %174 = vst.msk [vmem:[#allocation3 + $0x60] sm:$0xff] %vm9, 0.0
    %175 = vst.msk [vmem:[#allocation3 + $0x68] sm:$0xff] %vm9, 0.0
    %176 = vst.msk [vmem:[#allocation3 + $0x70] sm:$0x3] %vm12, 0.0
    %177 = vst.msk [vmem:[#allocation3 + $0x78] sm:$0xff] %vm9, 0.0
    %178 = vst.msk [vmem:[#allocation3 + $0x80] sm:$0xff] %vm9, 0.0
    %179 = vst.msk [vmem:[#allocation3 + $0x88] sm:$0x3] %vm12, 0.0
    %180 = vst.msk [vmem:[#allocation3 + $0x90] sm:$0xff] %vm9, 0.0
    %181 = vst.msk [vmem:[#allocation3 + $0x98] sm:$0xff] %vm9, 0.0
    %182 = vst.msk [vmem:[#allocation3 + $0xa0] sm:$0x3] %vm12, 0.0
    %183 = vst.msk [vmem:[#allocation3 + $0xa8] sm:$0xff] %vm9, 0.0
    %184 = vst.msk [vmem:[#allocation3 + $0xb0] sm:$0xff] %vm9, 0.0
    %185 = vst.msk [vmem:[#allocation3 + $0xb8] sm:$0x3] %vm12, 0.0
    %v186 = vld [vmem:[#allocation3] sm:$0xff]
    %v187 = vld [vmem:[#allocation3 + $0x8] sm:$0xff]
    %v188 = vld [vmem:[#allocation3 + $0x10] sm:$0x3]
    %v189 = vld [vmem:[#allocation3 + $0x18] sm:$0xff]
    %v190 = vld [vmem:[#allocation3 + $0x20] sm:$0xff]
    %v191 = vld [vmem:[#allocation3 + $0x28] sm:$0x3]
    %v192 = vld [vmem:[#allocation3 + $0x30] sm:$0xff]
    %v193 = vld [vmem:[#allocation3 + $0x38] sm:$0xff]
    %v194 = vld [vmem:[#allocation3 + $0x40] sm:$0x3]
    %v195 = vld [vmem:[#allocation3 + $0x48] sm:$0xff]
    %v196 = vld [vmem:[#allocation3 + $0x50] sm:$0xff]
    %v197 = vld [vmem:[#allocation3 + $0x58] sm:$0x3]
    %v198 = vld [vmem:[#allocation3 + $0x60] sm:$0xff]
    %v199 = vld [vmem:[#allocation3 + $0x68] sm:$0xff]
    %v200 = vld [vmem:[#allocation3 + $0x70] sm:$0x3]
    %v201 = vld [vmem:[#allocation3 + $0x78] sm:$0xff]
    %v202 = vld [vmem:[#allocation3 + $0x80] sm:$0xff]
    %v203 = vld [vmem:[#allocation3 + $0x88] sm:$0x3]
    %v204 = vld [vmem:[#allocation3 + $0x90] sm:$0xff]
    %v205 = vld [vmem:[#allocation3 + $0x98] sm:$0xff]
    %v206 = vld [vmem:[#allocation3 + $0xa0] sm:$0x3]
    %v207 = vld [vmem:[#allocation3 + $0xa8] sm:$0xff]
    %v208 = vld [vmem:[#allocation3 + $0xb0] sm:$0xff]
    %v209 = vld [vmem:[#allocation3 + $0xb8] sm:$0x3]
    %v210 = vld [vmem:[#allocation2] sm:$0xff]
    %v211 = vld [vmem:[#allocation2 + $0x8] sm:$0xff]
    %v212 = vld [vmem:[#allocation2 + $0x10] sm:$0x3]
    %v213 = vld [vmem:[#allocation2 + $0x30] sm:$0xff]
    %v214 = vld [vmem:[#allocation2 + $0x38] sm:$0xff]
    %v215 = vld [vmem:[#allocation2 + $0x40] sm:$0x3]
    %v216 = vld [vmem:[#allocation2 + $0x60] sm:$0xff]
    %v217 = vld [vmem:[#allocation2 + $0x68] sm:$0xff]
    %v218 = vld [vmem:[#allocation2 + $0x70] sm:$0x3]
    %v219 = vld [vmem:[#allocation2 + $0x90] sm:$0xff]
    %v220 = vld [vmem:[#allocation2 + $0x98] sm:$0xff]
    %v221 = vld [vmem:[#allocation2 + $0xa0] sm:$0x3]
    %v222 = vld [vmem:[#allocation2 + $0xc0] sm:$0xff]
    %v223 = vld [vmem:[#allocation2 + $0xc8] sm:$0xff]
    %v224 = vld [vmem:[#allocation2 + $0xd0] sm:$0x3]
    %v225 = vld [vmem:[#allocation2 + $0xf0] sm:$0xff]
    %v226 = vld [vmem:[#allocation2 + $0xf8] sm:$0xff]
    %v227 = vld [vmem:[#allocation2 + $0x100] sm:$0x3]
    %v228 = vld [vmem:[#allocation2 + $0x120] sm:$0xff]
    %v229 = vld [vmem:[#allocation2 + $0x128] sm:$0xff]
    %v230 = vld [vmem:[#allocation2 + $0x130] sm:$0x3]
    %v231 = vld [vmem:[#allocation2 + $0x150] sm:$0xff]
    %v232 = vld [vmem:[#allocation2 + $0x158] sm:$0xff]
    %v233 = vld [vmem:[#allocation2 + $0x160] sm:$0x3]
    %v234 = vmul.f32 %v210, 0.5
    %v235 = vmul.f32 %v211, 0.5
    %v236 = vmul.f32 %v212, 0.5
    %v237 = vmul.f32 %v213, 0.5
    %v238 = vmul.f32 %v214, 0.5
    %v239 = vmul.f32 %v215, 0.5
    %v240 = vmul.f32 %v216, 0.5
    %v241 = vmul.f32 %v217, 0.5
    %v242 = vmul.f32 %v218, 0.5
    %v243 = vmul.f32 %v219, 0.5
    %v244 = vmul.f32 %v220, 0.5
    %v245 = vmul.f32 %v221, 0.5
    %v246 = vmul.f32 %v222, 0.5
    %v247 = vmul.f32 %v223, 0.5
    %v248 = vmul.f32 %v224, 0.5
    %v249 = vmul.f32 %v225, 0.5
    %v250 = vmul.f32 %v226, 0.5
    %v251 = vmul.f32 %v227, 0.5
    %v252 = vmul.f32 %v228, 0.5
    %v253 = vmul.f32 %v229, 0.5
    %v254 = vmul.f32 %v230, 0.5
    %v255 = vmul.f32 %v231, 0.5
    %v256 = vmul.f32 %v232, 0.5
    %v257 = vmul.f32 %v233, 0.5
    %v258 = vadd.f32 %v186, %v234
    %v259 = vadd.f32 %v187, %v235
    %v260 = vadd.f32 %v188, %v236
    %v261 = vadd.f32 %v189, %v237
    %v262 = vadd.f32 %v190, %v238
    %v263 = vadd.f32 %v191, %v239
    %v264 = vadd.f32 %v192, %v240
    %v265 = vadd.f32 %v193, %v241
    %v266 = vadd.f32 %v194, %v242
    %v267 = vadd.f32 %v195, %v243
    %v268 = vadd.f32 %v196, %v244
    %v269 = vadd.f32 %v197, %v245
    %v270 = vadd.f32 %v198, %v246
    %v271 = vadd.f32 %v199, %v247
    %v272 = vadd.f32 %v200, %v248
    %v273 = vadd.f32 %v201, %v249
    %v274 = vadd.f32 %v202, %v250
    %v275 = vadd.f32 %v203, %v251
    %v276 = vadd.f32 %v204, %v252
    %v277 = vadd.f32 %v205, %v253
    %v278 = vadd.f32 %v206, %v254
    %v279 = vadd.f32 %v207, %v255
    %v280 = vadd.f32 %v208, %v256
    %v281 = vadd.f32 %v209, %v257
    %282 = vst.msk [vmem:[#allocation3] sm:$0xff] %vm9, %v258
    %283 = vst.msk [vmem:[#allocation3 + $0x8] sm:$0xff] %vm9, %v259
    %284 = vst.msk [vmem:[#allocation3 + $0x10] sm:$0x3] %vm12, %v260
    %285 = vst.msk [vmem:[#allocation3 + $0x18] sm:$0xff] %vm9, %v261
    %286 = vst.msk [vmem:[#allocation3 + $0x20] sm:$0xff] %vm9, %v262
    %287 = vst.msk [vmem:[#allocation3 + $0x28] sm:$0x3] %vm12, %v263
    %288 = vst.msk [vmem:[#allocation3 + $0x30] sm:$0xff] %vm9, %v264
    %289 = vst.msk [vmem:[#allocation3 + $0x38] sm:$0xff] %vm9, %v265
    %290 = vst.msk [vmem:[#allocation3 + $0x40] sm:$0x3] %vm12, %v266
    %291 = vst.msk [vmem:[#allocation3 + $0x48] sm:$0xff] %vm9, %v267
    %292 = vst.msk [vmem:[#allocation3 + $0x50] sm:$0xff] %vm9, %v268
    %293 = vst.msk [vmem:[#allocation3 + $0x58] sm:$0x3] %vm12, %v269
    %294 = vst.msk [vmem:[#allocation3 + $0x60] sm:$0xff] %vm9, %v270
    %295 = vst.msk [vmem:[#allocation3 + $0x68] sm:$0xff] %vm9, %v271
    %296 = vst.msk [vmem:[#allocation3 + $0x70] sm:$0x3] %vm12, %v272
    %297 = vst.msk [vmem:[#allocation3 + $0x78] sm:$0xff] %vm9, %v273
    %298 = vst.msk [vmem:[#allocation3 + $0x80] sm:$0xff] %vm9, %v274
    %299 = vst.msk [vmem:[#allocation3 + $0x88] sm:$0x3] %vm12, %v275
    %300 = vst.msk [vmem:[#allocation3 + $0x90] sm:$0xff] %vm9, %v276
    %301 = vst.msk [vmem:[#allocation3 + $0x98] sm:$0xff] %vm9, %v277
    %302 = vst.msk [vmem:[#allocation3 + $0xa0] sm:$0x3] %vm12, %v278
    %303 = vst.msk [vmem:[#allocation3 + $0xa8] sm:$0xff] %vm9, %v279
    %304 = vst.msk [vmem:[#allocation3 + $0xb0] sm:$0xff] %vm9, %v280
    %305 = vst.msk [vmem:[#allocation3 + $0xb8] sm:$0x3] %vm12, %v281
    %v306 = vld [vmem:[#allocation3] sm:$0xff]
    %v307 = vld [vmem:[#allocation3 + $0x8] sm:$0xff]
    %v308 = vld [vmem:[#allocation3 + $0x10] sm:$0x3]
    %v309 = vld [vmem:[#allocation3 + $0x18] sm:$0xff]
    %v310 = vld [vmem:[#allocation3 + $0x20] sm:$0xff]
    %v311 = vld [vmem:[#allocation3 + $0x28] sm:$0x3]
    %v312 = vld [vmem:[#allocation3 + $0x30] sm:$0xff]
    %v313 = vld [vmem:[#allocation3 + $0x38] sm:$0xff]
    %v314 = vld [vmem:[#allocation3 + $0x40] sm:$0x3]
    %v315 = vld [vmem:[#allocation3 + $0x48] sm:$0xff]
    %v316 = vld [vmem:[#allocation3 + $0x50] sm:$0xff]
    %v317 = vld [vmem:[#allocation3 + $0x58] sm:$0x3]
    %v318 = vld [vmem:[#allocation3 + $0x60] sm:$0xff]
    %v319 = vld [vmem:[#allocation3 + $0x68] sm:$0xff]
    %v320 = vld [vmem:[#allocation3 + $0x70] sm:$0x3]
    %v321 = vld [vmem:[#allocation3 + $0x78] sm:$0xff]
    %v322 = vld [vmem:[#allocation3 + $0x80] sm:$0xff]
    %v323 = vld [vmem:[#allocation3 + $0x88] sm:$0x3]
    %v324 = vld [vmem:[#allocation3 + $0x90] sm:$0xff]
    %v325 = vld [vmem:[#allocation3 + $0x98] sm:$0xff]
    %v326 = vld [vmem:[#allocation3 + $0xa0] sm:$0x3]
    %v327 = vld [vmem:[#allocation3 + $0xa8] sm:$0xff]
    %v328 = vld [vmem:[#allocation3 + $0xb0] sm:$0xff]
    %v329 = vld [vmem:[#allocation3 + $0xb8] sm:$0x3]
    %v330 = vld [vmem:[%s129] sm:$0xff]
    %v331 = vld [vmem:[%s129 + $0x8] sm:$0xff]
    %v332 = vld [vmem:[%s129 + $0x10] sm:$0x3]
    %v333 = vld [vmem:[%s129 + $0x30] sm:$0xff]
    %v334 = vld [vmem:[%s129 + $0x38] sm:$0xff]
    %v335 = vld [vmem:[%s129 + $0x40] sm:$0x3]
    %v336 = vld [vmem:[%s129 + $0x60] sm:$0xff]
    %v337 = vld [vmem:[%s129 + $0x68] sm:$0xff]
    %v338 = vld [vmem:[%s129 + $0x70] sm:$0x3]
    %v339 = vld [vmem:[%s129 + $0x90] sm:$0xff]
    %v340 = vld [vmem:[%s129 + $0x98] sm:$0xff]
    %v341 = vld [vmem:[%s129 + $0xa0] sm:$0x3]
    %v342 = vld [vmem:[%s129 + $0xc0] sm:$0xff]
    %v343 = vld [vmem:[%s129 + $0xc8] sm:$0xff]
    %v344 = vld [vmem:[%s129 + $0xd0] sm:$0x3]
    %v345 = vld [vmem:[%s129 + $0xf0] sm:$0xff]
    %v346 = vld [vmem:[%s129 + $0xf8] sm:$0xff]
    %v347 = vld [vmem:[%s129 + $0x100] sm:$0x3]
    %v348 = vld [vmem:[%s129 + $0x120] sm:$0xff]
    %v349 = vld [vmem:[%s129 + $0x128] sm:$0xff]
    %v350 = vld [vmem:[%s129 + $0x130] sm:$0x3]
    %v351 = vld [vmem:[%s129 + $0x150] sm:$0xff]
    %v352 = vld [vmem:[%s129 + $0x158] sm:$0xff]
    %v353 = vld [vmem:[%s129 + $0x160] sm:$0x3]
    %v354 = vadd.f32 %v306, %v330
    %v355 = vadd.f32 %v307, %v331
    %v356 = vadd.f32 %v308, %v332
    %v357 = vadd.f32 %v309, %v333
    %v358 = vadd.f32 %v310, %v334
    %v359 = vadd.f32 %v311, %v335
    %v360 = vadd.f32 %v312, %v336
    %v361 = vadd.f32 %v313, %v337
    %v362 = vadd.f32 %v314, %v338
    %v363 = vadd.f32 %v315, %v339
    %v364 = vadd.f32 %v316, %v340
    %v365 = vadd.f32 %v317, %v341
    %v366 = vadd.f32 %v318, %v342
    %v367 = vadd.f32 %v319, %v343
    %v368 = vadd.f32 %v320, %v344
    %v369 = vadd.f32 %v321, %v345
    %v370 = vadd.f32 %v322, %v346
    %v371 = vadd.f32 %v323, %v347
    %v372 = vadd.f32 %v324, %v348
    %v373 = vadd.f32 %v325, %v349
    %v374 = vadd.f32 %v326, %v350
    %v375 = vadd.f32 %v327, %v351
    %v376 = vadd.f32 %v328, %v352
    %v377 = vadd.f32 %v329, %v353
    %378 = vst.msk [vmem:[#allocation3] sm:$0xff] %vm9, %v354
    %379 = vst.msk [vmem:[#allocation3 + $0x8] sm:$0xff] %vm9, %v355
    %380 = vst.msk [vmem:[#allocation3 + $0x10] sm:$0x3] %vm12, %v356
    %381 = vst.msk [vmem:[#allocation3 + $0x18] sm:$0xff] %vm9, %v357
    %382 = vst.msk [vmem:[#allocation3 + $0x20] sm:$0xff] %vm9, %v358
    %383 = vst.msk [vmem:[#allocation3 + $0x28] sm:$0x3] %vm12, %v359
    %384 = vst.msk [vmem:[#allocation3 + $0x30] sm:$0xff] %vm9, %v360
    %385 = vst.msk [vmem:[#allocation3 + $0x38] sm:$0xff] %vm9, %v361
    %386 = vst.msk [vmem:[#allocation3 + $0x40] sm:$0x3] %vm12, %v362
    %387 = vst.msk [vmem:[#allocation3 + $0x48] sm:$0xff] %vm9, %v363
    %388 = vst.msk [vmem:[#allocation3 + $0x50] sm:$0xff] %vm9, %v364
    %389 = vst.msk [vmem:[#allocation3 + $0x58] sm:$0x3] %vm12, %v365
    %390 = vst.msk [vmem:[#allocation3 + $0x60] sm:$0xff] %vm9, %v366
    %391 = vst.msk [vmem:[#allocation3 + $0x68] sm:$0xff] %vm9, %v367
    %392 = vst.msk [vmem:[#allocation3 + $0x70] sm:$0x3] %vm12, %v368
    %393 = vst.msk [vmem:[#allocation3 + $0x78] sm:$0xff] %vm9, %v369
    %394 = vst.msk [vmem:[#allocation3 + $0x80] sm:$0xff] %vm9, %v370
    %395 = vst.msk [vmem:[#allocation3 + $0x88] sm:$0x3] %vm12, %v371
    %396 = vst.msk [vmem:[#allocation3 + $0x90] sm:$0xff] %vm9, %v372
    %397 = vst.msk [vmem:[#allocation3 + $0x98] sm:$0xff] %vm9, %v373
    %398 = vst.msk [vmem:[#allocation3 + $0xa0] sm:$0x3] %vm12, %v374
    %399 = vst.msk [vmem:[#allocation3 + $0xa8] sm:$0xff] %vm9, %v375
    %400 = vst.msk [vmem:[#allocation3 + $0xb0] sm:$0xff] %vm9, %v376
    %401 = vst.msk [vmem:[#allocation3 + $0xb8] sm:$0x3] %vm12, %v377
    %v402 = vld [vmem:[#allocation3] sm:$0xff]
    %v403 = vld [vmem:[#allocation3 + $0x8] sm:$0xff]
    %v404 = vld [vmem:[#allocation3 + $0x10] sm:$0x3]
    %v405 = vld [vmem:[#allocation3 + $0x18] sm:$0xff]
    %v406 = vld [vmem:[#allocation3 + $0x20] sm:$0xff]
    %v407 = vld [vmem:[#allocation3 + $0x28] sm:$0x3]
    %v408 = vld [vmem:[#allocation3 + $0x30] sm:$0xff]
    %v409 = vld [vmem:[#allocation3 + $0x38] sm:$0xff]
    %v410 = vld [vmem:[#allocation3 + $0x40] sm:$0x3]
    %v411 = vld [vmem:[#allocation3 + $0x48] sm:$0xff]
    %v412 = vld [vmem:[#allocation3 + $0x50] sm:$0xff]
    %v413 = vld [vmem:[#allocation3 + $0x58] sm:$0x3]
    %v414 = vld [vmem:[#allocation3 + $0x60] sm:$0xff]
    %v415 = vld [vmem:[#allocation3 + $0x68] sm:$0xff]
    %v416 = vld [vmem:[#allocation3 + $0x70] sm:$0x3]
    %v417 = vld [vmem:[#allocation3 + $0x78] sm:$0xff]
    %v418 = vld [vmem:[#allocation3 + $0x80] sm:$0xff]
    %v419 = vld [vmem:[#allocation3 + $0x88] sm:$0x3]
    %v420 = vld [vmem:[#allocation3 + $0x90] sm:$0xff]
    %v421 = vld [vmem:[#allocation3 + $0x98] sm:$0xff]
    %v422 = vld [vmem:[#allocation3 + $0xa0] sm:$0x3]
    %v423 = vld [vmem:[#allocation3 + $0xa8] sm:$0xff]
    %v424 = vld [vmem:[#allocation3 + $0xb0] sm:$0xff]
    %v425 = vld [vmem:[#allocation3 + $0xb8] sm:$0x3]
    %s426 = scalar_lea.vmem [#allocation2], 48
    %v427 = vld [vmem:[%s426] sm:$0xff]
    %v428 = vld [vmem:[%s426 + $0x8] sm:$0xff]
    %v429 = vld [vmem:[%s426 + $0x10] sm:$0x3]
    %v430 = vld [vmem:[%s426 + $0x30] sm:$0xff]
    %v431 = vld [vmem:[%s426 + $0x38] sm:$0xff]
    %v432 = vld [vmem:[%s426 + $0x40] sm:$0x3]
    %v433 = vld [vmem:[%s426 + $0x60] sm:$0xff]
    %v434 = vld [vmem:[%s426 + $0x68] sm:$0xff]
    %v435 = vld [vmem:[%s426 + $0x70] sm:$0x3]
    %v436 = vld [vmem:[%s426 + $0x90] sm:$0xff]
    %v437 = vld [vmem:[%s426 + $0x98] sm:$0xff]
    %v438 = vld [vmem:[%s426 + $0xa0] sm:$0x3]
    %v439 = vld [vmem:[%s426 + $0xc0] sm:$0xff]
    %v440 = vld [vmem:[%s426 + $0xc8] sm:$0xff]
    %v441 = vld [vmem:[%s426 + $0xd0] sm:$0x3]
    %v442 = vld [vmem:[%s426 + $0xf0] sm:$0xff]
    %v443 = vld [vmem:[%s426 + $0xf8] sm:$0xff]
    %v444 = vld [vmem:[%s426 + $0x100] sm:$0x3]
    %v445 = vld [vmem:[%s426 + $0x120] sm:$0xff]
    %v446 = vld [vmem:[%s426 + $0x128] sm:$0xff]
    %v447 = vld [vmem:[%s426 + $0x130] sm:$0x3]
    %v448 = vld [vmem:[%s426 + $0x150] sm:$0xff]
    %v449 = vld [vmem:[%s426 + $0x158] sm:$0xff]
    %v450 = vld [vmem:[%s426 + $0x160] sm:$0x3]
    %v451 = vmul.f32 %v427, 0.5
    %v452 = vmul.f32 %v428, 0.5
    %v453 = vmul.f32 %v429, 0.5
    %v454 = vmul.f32 %v430, 0.5
    %v455 = vmul.f32 %v431, 0.5
    %v456 = vmul.f32 %v432, 0.5
    %v457 = vmul.f32 %v433, 0.5
    %v458 = vmul.f32 %v434, 0.5
    %v459 = vmul.f32 %v435, 0.5
    %v460 = vmul.f32 %v436, 0.5
    %v461 = vmul.f32 %v437, 0.5
    %v462 = vmul.f32 %v438, 0.5
    %v463 = vmul.f32 %v439, 0.5
    %v464 = vmul.f32 %v440, 0.5
    %v465 = vmul.f32 %v441, 0.5
    %v466 = vmul.f32 %v442, 0.5
    %v467 = vmul.f32 %v443, 0.5
    %v468 = vmul.f32 %v444, 0.5
    %v469 = vmul.f32 %v445, 0.5
    %v470 = vmul.f32 %v446, 0.5
    %v471 = vmul.f32 %v447, 0.5
    %v472 = vmul.f32 %v448, 0.5
    %v473 = vmul.f32 %v449, 0.5
    %v474 = vmul.f32 %v450, 0.5
    %v475 = vadd.f32 %v402, %v451
    %v476 = vadd.f32 %v403, %v452
    %v477 = vadd.f32 %v404, %v453
    %v478 = vadd.f32 %v405, %v454
    %v479 = vadd.f32 %v406, %v455
    %v480 = vadd.f32 %v407, %v456
    %v481 = vadd.f32 %v408, %v457
    %v482 = vadd.f32 %v409, %v458
    %v483 = vadd.f32 %v410, %v459
    %v484 = vadd.f32 %v411, %v460
    %v485 = vadd.f32 %v412, %v461
    %v486 = vadd.f32 %v413, %v462
    %v487 = vadd.f32 %v414, %v463
    %v488 = vadd.f32 %v415, %v464
    %v489 = vadd.f32 %v416, %v465
    %v490 = vadd.f32 %v417, %v466
    %v491 = vadd.f32 %v418, %v467
    %v492 = vadd.f32 %v419, %v468
    %v493 = vadd.f32 %v420, %v469
    %v494 = vadd.f32 %v421, %v470
    %v495 = vadd.f32 %v422, %v471
    %v496 = vadd.f32 %v423, %v472
    %v497 = vadd.f32 %v424, %v473
    %v498 = vadd.f32 %v425, %v474
    %499 = vst.msk [vmem:[#allocation3] sm:$0xff] %vm9, %v475
    %500 = vst.msk [vmem:[#allocation3 + $0x8] sm:$0xff] %vm9, %v476
    %501 = vst.msk [vmem:[#allocation3 + $0x10] sm:$0x3] %vm12, %v477
    %502 = vst.msk [vmem:[#allocation3 + $0x18] sm:$0xff] %vm9, %v478
    %503 = vst.msk [vmem:[#allocation3 + $0x20] sm:$0xff] %vm9, %v479
    %504 = vst.msk [vmem:[#allocation3 + $0x28] sm:$0x3] %vm12, %v480
    %505 = vst.msk [vmem:[#allocation3 + $0x30] sm:$0xff] %vm9, %v481
    %506 = vst.msk [vmem:[#allocation3 + $0x38] sm:$0xff] %vm9, %v482
    %507 = vst.msk [vmem:[#allocation3 + $0x40] sm:$0x3] %vm12, %v483
    %508 = vst.msk [vmem:[#allocation3 + $0x48] sm:$0xff] %vm9, %v484
    %509 = vst.msk [vmem:[#allocation3 + $0x50] sm:$0xff] %vm9, %v485
    %510 = vst.msk [vmem:[#allocation3 + $0x58] sm:$0x3] %vm12, %v486
    %511 = vst.msk [vmem:[#allocation3 + $0x60] sm:$0xff] %vm9, %v487
    %512 = vst.msk [vmem:[#allocation3 + $0x68] sm:$0xff] %vm9, %v488
    %513 = vst.msk [vmem:[#allocation3 + $0x70] sm:$0x3] %vm12, %v489
    %514 = vst.msk [vmem:[#allocation3 + $0x78] sm:$0xff] %vm9, %v490
    %515 = vst.msk [vmem:[#allocation3 + $0x80] sm:$0xff] %vm9, %v491
    %516 = vst.msk [vmem:[#allocation3 + $0x88] sm:$0x3] %vm12, %v492
    %517 = vst.msk [vmem:[#allocation3 + $0x90] sm:$0xff] %vm9, %v493
    %518 = vst.msk [vmem:[#allocation3 + $0x98] sm:$0xff] %vm9, %v494
    %519 = vst.msk [vmem:[#allocation3 + $0xa0] sm:$0x3] %vm12, %v495
    %520 = vst.msk [vmem:[#allocation3 + $0xa8] sm:$0xff] %vm9, %v496
    %521 = vst.msk [vmem:[#allocation3 + $0xb0] sm:$0xff] %vm9, %v497
    %522 = vst.msk [vmem:[#allocation3 + $0xb8] sm:$0x3] %vm12, %v498
    %523 = vst.msk [vmem:[#allocation4] sm:$0xff] %vm9, 0.0
    %524 = vst.msk [vmem:[#allocation4 + $0x8] sm:$0xff] %vm9, 0.0
    %525 = vst.msk [vmem:[#allocation4 + $0x10] sm:$0xff] %vm9, 0.0
    %526 = vst.msk [vmem:[#allocation4 + $0x18] sm:$0xff] %vm9, 0.0
    %527 = vst.msk [vmem:[#allocation4 + $0x20] sm:$0xff] %vm9, 0.0
    %528 = vst.msk [vmem:[#allocation4 + $0x28] sm:$0xff] %vm9, 0.0
    %529 = vst.msk [vmem:[#allocation4 + $0x30] sm:$0xff] %vm9, 0.0
    %530 = vst.msk [vmem:[#allocation4 + $0x38] sm:$0xff] %vm9, 0.0
    %v531 = vld [vmem:[#allocation4] sm:$0xff]
    %v532 = vld [vmem:[#allocation4 + $0x8] sm:$0xff]
    %v533 = vld [vmem:[#allocation4 + $0x10] sm:$0xff]
    %v534 = vld [vmem:[#allocation4 + $0x18] sm:$0xff]
    %v535 = vld [vmem:[#allocation4 + $0x20] sm:$0xff]
    %v536 = vld [vmem:[#allocation4 + $0x28] sm:$0xff]
    %v537 = vld [vmem:[#allocation4 + $0x30] sm:$0xff]
    %v538 = vld [vmem:[#allocation4 + $0x38] sm:$0xff]
    %v539 = vld [vmem:[#allocation3] ss:$2 sm:$0xff]
    %s540 = scalar_lea.vmem [#allocation3], 24
    %v541 = vld [vmem:[%s540] ss:$2 sm:$0xff]
    %s542 = scalar_lea.vmem [#allocation3], 48
    %v543 = vld [vmem:[%s542] ss:$2 sm:$0xff]
    %s544 = scalar_lea.vmem [#allocation3], 72
    %v545 = vld [vmem:[%s544] ss:$2 sm:$0xff]
    %s546 = scalar_lea.vmem [#allocation3], 96
    %v547 = vld [vmem:[%s546] ss:$2 sm:$0xff]
    %s548 = scalar_lea.vmem [#allocation3], 120
    %v549 = vld [vmem:[%s548] ss:$2 sm:$0xff]
    %s550 = scalar_lea.vmem [#allocation3], 144
    %v551 = vld [vmem:[%s550] ss:$2 sm:$0xff]
    %s552 = scalar_lea.vmem [#allocation3], 168
    %v553 = vld [vmem:[%s552] ss:$2 sm:$0xff]
    %v554 = vmul.f32 %v539, 0.125
    %v555 = vmul.f32 %v541, 0.125
    %v556 = vmul.f32 %v543, 0.125
    %v557 = vmul.f32 %v545, 0.125
    %v558 = vmul.f32 %v547, 0.125
    %v559 = vmul.f32 %v549, 0.125
    %v560 = vmul.f32 %v551, 0.125
    %v561 = vmul.f32 %v553, 0.125
    %v562 = vadd.f32 %v531, %v554
    %v563 = vadd.f32 %v532, %v555
    %v564 = vadd.f32 %v533, %v556
    %v565 = vadd.f32 %v534, %v557
    %v566 = vadd.f32 %v535, %v558
    %v567 = vadd.f32 %v536, %v559
    %v568 = vadd.f32 %v537, %v560
    %v569 = vadd.f32 %v538, %v561
    %570 = vst.msk [vmem:[#allocation4] sm:$0xff] %vm9, %v562
    %571 = vst.msk [vmem:[#allocation4 + $0x8] sm:$0xff] %vm9, %v563
    %572 = vst.msk [vmem:[#allocation4 + $0x10] sm:$0xff] %vm9, %v564
    %573 = vst.msk [vmem:[#allocation4 + $0x18] sm:$0xff] %vm9, %v565
    %574 = vst.msk [vmem:[#allocation4 + $0x20] sm:$0xff] %vm9, %v566
    %575 = vst.msk [vmem:[#allocation4 + $0x28] sm:$0xff] %vm9, %v567
    %576 = vst.msk [vmem:[#allocation4 + $0x30] sm:$0xff] %vm9, %v568
    %577 = vst.msk [vmem:[#allocation4 + $0x38] sm:$0xff] %vm9, %v569
    %v578 = vld [vmem:[#allocation4] sm:$0xff]
    %v579 = vld [vmem:[#allocation4 + $0x8] sm:$0xff]
    %v580 = vld [vmem:[#allocation4 + $0x10] sm:$0xff]
    %v581 = vld [vmem:[#allocation4 + $0x18] sm:$0xff]
    %v582 = vld [vmem:[#allocation4 + $0x20] sm:$0xff]
    %v583 = vld [vmem:[#allocation4 + $0x28] sm:$0xff]
    %v584 = vld [vmem:[#allocation4 + $0x30] sm:$0xff]
    %v585 = vld [vmem:[#allocation4 + $0x38] sm:$0xff]
    %s586 = scalar_lea.vmem [#allocation3], 1
    %v587 = vld [vmem:[%s586] ss:$2 sm:$0xff]
    %s588 = scalar_lea.vmem [#allocation3], 25
    %v589 = vld [vmem:[%s588] ss:$2 sm:$0xff]
    %s590 = scalar_lea.vmem [#allocation3], 49
    %v591 = vld [vmem:[%s590] ss:$2 sm:$0xff]
    %s592 = scalar_lea.vmem [#allocation3], 73
    %v593 = vld [vmem:[%s592] ss:$2 sm:$0xff]
    %s594 = scalar_lea.vmem [#allocation3], 97
    %v595 = vld [vmem:[%s594] ss:$2 sm:$0xff]
    %s596 = scalar_lea.vmem [#allocation3], 121
    %v597 = vld [vmem:[%s596] ss:$2 sm:$0xff]
    %s598 = scalar_lea.vmem [#allocation3], 145
    %v599 = vld [vmem:[%s598] ss:$2 sm:$0xff]
    %s600 = scalar_lea.vmem [#allocation3], 169
    %v601 = vld [vmem:[%s600] ss:$2 sm:$0xff]
    %v602 = vmul.f32 %v587, 0.25
    %v603 = vmul.f32 %v589, 0.25
    %v604 = vmul.f32 %v591, 0.25
    %v605 = vmul.f32 %v593, 0.25
    %v606 = vmul.f32 %v595, 0.25
    %v607 = vmul.f32 %v597, 0.25
    %v608 = vmul.f32 %v599, 0.25
    %v609 = vmul.f32 %v601, 0.25
    %v610 = vadd.f32 %v578, %v602
    %v611 = vadd.f32 %v579, %v603
    %v612 = vadd.f32 %v580, %v604
    %v613 = vadd.f32 %v581, %v605
    %v614 = vadd.f32 %v582, %v606
    %v615 = vadd.f32 %v583, %v607
    %v616 = vadd.f32 %v584, %v608
    %v617 = vadd.f32 %v585, %v609
    %618 = vst.msk [vmem:[#allocation4] sm:$0xff] %vm9, %v610
    %619 = vst.msk [vmem:[#allocation4 + $0x8] sm:$0xff] %vm9, %v611
    %620 = vst.msk [vmem:[#allocation4 + $0x10] sm:$0xff] %vm9, %v612
    %621 = vst.msk [vmem:[#allocation4 + $0x18] sm:$0xff] %vm9, %v613
    %622 = vst.msk [vmem:[#allocation4 + $0x20] sm:$0xff] %vm9, %v614
    %623 = vst.msk [vmem:[#allocation4 + $0x28] sm:$0xff] %vm9, %v615
    %624 = vst.msk [vmem:[#allocation4 + $0x30] sm:$0xff] %vm9, %v616
    %625 = vst.msk [vmem:[#allocation4 + $0x38] sm:$0xff] %vm9, %v617
    %v626 = vld [vmem:[#allocation4] sm:$0xff]
    %v627 = vld [vmem:[#allocation4 + $0x8] sm:$0xff]
    %v628 = vld [vmem:[#allocation4 + $0x10] sm:$0xff]
    %v629 = vld [vmem:[#allocation4 + $0x18] sm:$0xff]
    %v630 = vld [vmem:[#allocation4 + $0x20] sm:$0xff]
    %v631 = vld [vmem:[#allocation4 + $0x28] sm:$0xff]
    %v632 = vld [vmem:[#allocation4 + $0x30] sm:$0xff]
    %v633 = vld [vmem:[#allocation4 + $0x38] sm:$0xff]
    %s634 = scalar_lea.vmem [#allocation3], 2
    %v635 = vld [vmem:[%s634] ss:$2 sm:$0xff]
    %s636 = scalar_lea.vmem [#allocation3], 26
    %v637 = vld [vmem:[%s636] ss:$2 sm:$0xff]
    %s638 = scalar_lea.vmem [#allocation3], 50
    %v639 = vld [vmem:[%s638] ss:$2 sm:$0xff]
    %s640 = scalar_lea.vmem [#allocation3], 74
    %v641 = vld [vmem:[%s640] ss:$2 sm:$0xff]
    %s642 = scalar_lea.vmem [#allocation3], 98
    %v643 = vld [vmem:[%s642] ss:$2 sm:$0xff]
    %s644 = scalar_lea.vmem [#allocation3], 122
    %v645 = vld [vmem:[%s644] ss:$2 sm:$0xff]
    %s646 = scalar_lea.vmem [#allocation3], 146
    %v647 = vld [vmem:[%s646] ss:$2 sm:$0xff]
    %s648 = scalar_lea.vmem [#allocation3], 170
    %v649 = vld [vmem:[%s648] ss:$2 sm:$0xff]
    %v650 = vmul.f32 %v635, 0.125
    %v651 = vmul.f32 %v637, 0.125
    %v652 = vmul.f32 %v639, 0.125
    %v653 = vmul.f32 %v641, 0.125
    %v654 = vmul.f32 %v643, 0.125
    %v655 = vmul.f32 %v645, 0.125
    %v656 = vmul.f32 %v647, 0.125
    %v657 = vmul.f32 %v649, 0.125
    %v658 = vadd.f32 %v626, %v650
    %v659 = vadd.f32 %v627, %v651
    %v660 = vadd.f32 %v628, %v652
    %v661 = vadd.f32 %v629, %v653
    %v662 = vadd.f32 %v630, %v654
    %v663 = vadd.f32 %v631, %v655
    %v664 = vadd.f32 %v632, %v656
    %v665 = vadd.f32 %v633, %v657
    %666 = vst.msk [vmem:[#allocation4] sm:$0xff] %vm9, %v658
    %667 = vst.msk [vmem:[#allocation4 + $0x8] sm:$0xff] %vm9, %v659
    %668 = vst.msk [vmem:[#allocation4 + $0x10] sm:$0xff] %vm9, %v660
    %669 = vst.msk [vmem:[#allocation4 + $0x18] sm:$0xff] %vm9, %v661
    %670 = vst.msk [vmem:[#allocation4 + $0x20] sm:$0xff] %vm9, %v662
    %671 = vst.msk [vmem:[#allocation4 + $0x28] sm:$0xff] %vm9, %v663
    %672 = vst.msk [vmem:[#allocation4 + $0x30] sm:$0xff] %vm9, %v664
    %673 = vst.msk [vmem:[#allocation4 + $0x38] sm:$0xff] %vm9, %v665
    %v674 = vld [vmem:[#allocation4] sm:$0xff]
    %v675 = vld [vmem:[#allocation4 + $0x8] sm:$0xff]
    %v676 = vld [vmem:[#allocation4 + $0x10] sm:$0xff]
    %v677 = vld [vmem:[#allocation4 + $0x18] sm:$0xff]
    %v678 = vld [vmem:[#allocation4 + $0x20] sm:$0xff]
    %v679 = vld [vmem:[#allocation4 + $0x28] sm:$0xff]
    %v680 = vld [vmem:[#allocation4 + $0x30] sm:$0xff]
    %v681 = vld [vmem:[#allocation4 + $0x38] sm:$0xff]
    %v682 = vadd.f32 %v674, 1e-12
    %v683 = vadd.f32 %v675, 1e-12
    %v684 = vadd.f32 %v676, 1e-12
    %v685 = vadd.f32 %v677, 1e-12
    %v686 = vadd.f32 %v678, 1e-12
    %v687 = vadd.f32 %v679, 1e-12
    %v688 = vadd.f32 %v680, 1e-12
    %v689 = vadd.f32 %v681, 1e-12
    %v690 = vrsqrt.pop %v682
    %v691 = vmul.f32 %v690, %v682
    %v692 = vmul.f32 %v691, %v690
    %v693 = vmul.f32 0.5, %v692
    %v694 = vsub.f32 1.5, %v693
    %v695 = vmul.f32 %v690, %v694
    %v696 = vmul.f32 %v682, %v695
    %vm697 = vcmp.eq.f32.partialorder %v682, inf
    %v698 = vsel %vm697, %v682, %v696
    %vm699 = vcmp.eq.f32.partialorder %v682, 0.0
    %v700 = vand.u32 %v682, 2147483648
    %v701 = vsel %vm699, %v700, %v698
    %v702 = vrsqrt.pop %v683
    %v703 = vmul.f32 %v702, %v683
    %v704 = vmul.f32 %v703, %v702
    %v705 = vmul.f32 0.5, %v704
    %v706 = vsub.f32 1.5, %v705
    %v707 = vmul.f32 %v702, %v706
    %v708 = vmul.f32 %v683, %v707
    %vm709 = vcmp.eq.f32.partialorder %v683, inf
    %v710 = vsel %vm709, %v683, %v708
    %vm711 = vcmp.eq.f32.partialorder %v683, 0.0
    %v712 = vand.u32 %v683, 2147483648
    %v713 = vsel %vm711, %v712, %v710
    %v714 = vrsqrt.pop %v684
    %v715 = vmul.f32 %v714, %v684
    %v716 = vmul.f32 %v715, %v714
    %v717 = vmul.f32 0.5, %v716
    %v718 = vsub.f32 1.5, %v717
    %v719 = vmul.f32 %v714, %v718
    %v720 = vmul.f32 %v684, %v719
    %vm721 = vcmp.eq.f32.partialorder %v684, inf
    %v722 = vsel %vm721, %v684, %v720
    %vm723 = vcmp.eq.f32.partialorder %v684, 0.0
    %v724 = vand.u32 %v684, 2147483648
    %v725 = vsel %vm723, %v724, %v722
    %v726 = vrsqrt.pop %v685
    %v727 = vmul.f32 %v726, %v685
    %v728 = vmul.f32 %v727, %v726
    %v729 = vmul.f32 0.5, %v728
    %v730 = vsub.f32 1.5, %v729
    %v731 = vmul.f32 %v726, %v730
    %v732 = vmul.f32 %v685, %v731
    %vm733 = vcmp.eq.f32.partialorder %v685, inf
    %v734 = vsel %vm733, %v685, %v732
    %vm735 = vcmp.eq.f32.partialorder %v685, 0.0
    %v736 = vand.u32 %v685, 2147483648
    %v737 = vsel %vm735, %v736, %v734
    %v738 = vrsqrt.pop %v686
    %v739 = vmul.f32 %v738, %v686
    %v740 = vmul.f32 %v739, %v738
    %v741 = vmul.f32 0.5, %v740
    %v742 = vsub.f32 1.5, %v741
    %v743 = vmul.f32 %v738, %v742
    %v744 = vmul.f32 %v686, %v743
    %vm745 = vcmp.eq.f32.partialorder %v686, inf
    %v746 = vsel %vm745, %v686, %v744
    %vm747 = vcmp.eq.f32.partialorder %v686, 0.0
    %v748 = vand.u32 %v686, 2147483648
    %v749 = vsel %vm747, %v748, %v746
    %v750 = vrsqrt.pop %v687
    %v751 = vmul.f32 %v750, %v687
    %v752 = vmul.f32 %v751, %v750
    %v753 = vmul.f32 0.5, %v752
    %v754 = vsub.f32 1.5, %v753
    %v755 = vmul.f32 %v750, %v754
    %v756 = vmul.f32 %v687, %v755
    %vm757 = vcmp.eq.f32.partialorder %v687, inf
    %v758 = vsel %vm757, %v687, %v756
    %vm759 = vcmp.eq.f32.partialorder %v687, 0.0
    %v760 = vand.u32 %v687, 2147483648
    %v761 = vsel %vm759, %v760, %v758
    %v762 = vrsqrt.pop %v688
    %v763 = vmul.f32 %v762, %v688
    %v764 = vmul.f32 %v763, %v762
    %v765 = vmul.f32 0.5, %v764
    %v766 = vsub.f32 1.5, %v765
    %v767 = vmul.f32 %v762, %v766
    %v768 = vmul.f32 %v688, %v767
    %vm769 = vcmp.eq.f32.partialorder %v688, inf
    %v770 = vsel %vm769, %v688, %v768
    %vm771 = vcmp.eq.f32.partialorder %v688, 0.0
    %v772 = vand.u32 %v688, 2147483648
    %v773 = vsel %vm771, %v772, %v770
    %v774 = vrsqrt.pop %v689
    %v775 = vmul.f32 %v774, %v689
    %v776 = vmul.f32 %v775, %v774
    %v777 = vmul.f32 0.5, %v776
    %v778 = vsub.f32 1.5, %v777
    %v779 = vmul.f32 %v774, %v778
    %v780 = vmul.f32 %v689, %v779
    %vm781 = vcmp.eq.f32.partialorder %v689, inf
    %v782 = vsel %vm781, %v689, %v780
    %vm783 = vcmp.eq.f32.partialorder %v689, 0.0
    %v784 = vand.u32 %v689, 2147483648
    %v785 = vsel %vm783, %v784, %v782
    %786 = vst.msk [vmem:[#allocation5] sm:$0xff] %vm9, %v701
    %787 = vst.msk [vmem:[#allocation5 + $0x8] sm:$0xff] %vm9, %v713
    %788 = vst.msk [vmem:[#allocation5 + $0x10] sm:$0xff] %vm9, %v725
    %789 = vst.msk [vmem:[#allocation5 + $0x18] sm:$0xff] %vm9, %v737
    %790 = vst.msk [vmem:[#allocation5 + $0x20] sm:$0xff] %vm9, %v749
    %791 = vst.msk [vmem:[#allocation5 + $0x28] sm:$0xff] %vm9, %v761
    %792 = vst.msk [vmem:[#allocation5 + $0x30] sm:$0xff] %vm9, %v773
    %793 = vst.msk [vmem:[#allocation5 + $0x38] sm:$0xff] %vm9, %v785
    // Predicated region
    $region6: #{tpu_custom_call.1} parent=1 // pred_check
      _
    $region7: #{tpu_custom_call.1} parent=1 // pred_check_branch
      %795 = sbr.rel (0) target = $region9
    $region8: #{tpu_custom_call.1} parent=1 // pred_region
      %797 = vsyncadd [#allocation6], 0
      %s798 = sshll.u32 [#allocation5], 4
      %s799 = int_to_ptr.vmem [resolvable:$true] %s798
      %s800 = sshll.u32 %s1, 4
      %s801 = int_to_ptr.hbm [resolvable:$true] %s800
      %806 = dma.vmem_to_hbm [thread:$0]  %s799, 1024, %s801, [#allocation6], 128, 128, 8
    $region9: #{tpu_custom_call.1} parent=1 // pred_fallthru
      _
    // Predicated region
    $region10: #{tpu_custom_call.1} parent=1 // pred_check
      _
    $region11: #{tpu_custom_call.1} parent=1 // pred_check_branch
      %808 = sbr.rel (0) target = $region13
    $region12: #{tpu_custom_call.1} parent=1 // pred_region
      %810 = dma.done [#allocation6], 1024
    $region13: #{tpu_custom_call.1} parent=1 // pred_fallthru
      _
    %811 = vsyncpa [#allocation6], 1

</llo_original>
